<compile_context>
chip_gen: v5e
topology: v5e:2x2
jax: 0.10.0
libtpu: 0.0.40
codegen_flags: <defaults>
</compile_context>

<pallas_src>
import functools

import jax
import jax.numpy as jnp
from jax.experimental import pallas as pl
from jax.experimental.pallas import tpu as pltpu

SUBLANE = 8


def _round_up(x, m):
    return ((x + m - 1) // m) * m


def _make_kernel(n_layers):
    def kernel(*refs):
        # refs = (s_ref, w1, b1, w2, b2, ..., wN, bN, o_ref)
        s_ref = refs[0]
        o_ref = refs[-1]
        h = s_ref[...].astype(jnp.float32)
        for li in range(n_layers):
            w_ref = refs[1 + 2 * li]
            b_ref = refs[2 + 2 * li]
            h = jnp.dot(h, w_ref[...], preferred_element_type=jnp.float32) + b_ref[...]
            # Exact sigmoid via a single EUP op: sigmoid(x) = 0.5*tanh(0.5*x)+0.5
            h = 0.5 * jnp.tanh(0.5 * h) + 0.5
        o_ref[...] = h.astype(o_ref.dtype)

    return kernel


@functools.partial(jax.jit, static_argnames=("max_batch_tile",))
def mlpx1s_forward(s, params, *, max_batch_tile=2048):
    """Fused MLPx1s forward.

    params = [(W1, b1), (W2, b2), ...] with Wi: (in, out), bi: (out,) or (1, out).
    Returns sigmoid(... sigmoid(s @ W1 + b1) ... @ Wn + bn), shape (batch, dim_x),
    in s.dtype.
    """
    batch, dim_s = s.shape
    n_layers = len(params)
    dims = [dim_s] + [w.shape[1] for (w, _) in params]
    dim_x = dims[-1]

    # Resident parameters, f32, biases as (1, out) rows.  No feature padding.
    flat_params = []
    for (w, b) in params:
        flat_params += [w.astype(jnp.float32), b.reshape(1, -1).astype(jnp.float32)]

    # --- batch tiling ---------------------------------------------------------
    # Small batches: one tile.  Larger batches: split into >=2 parallel grid
    # steps (engages both TensorCores on v7x), capped at max_batch_tile rows.
    if batch <= 512:
        batch_tile = _round_up(batch, SUBLANE)
    else:
        half = _round_up((batch + 1) // 2, SUBLANE)
        batch_tile = min(half, _round_up(max_batch_tile, SUBLANE))
    batch_p = _round_up(batch, batch_tile)

    s_in = s
    if batch_p != batch:
        s_in = jnp.pad(s, ((0, batch_p - batch), (0, 0)))

    grid = (batch_p // batch_tile,)

    # --- block specs ----------------------------------------------------------
    # Activations stream per batch tile; params use full-extent, constant-index
    # blocks so they stay resident in VMEM across grid steps.
    in_specs = [pl.BlockSpec((batch_tile, dim_s), lambda i: (i, 0))]
    for p in flat_params:
        in_specs.append(pl.BlockSpec(p.shape, lambda i: (0, 0)))
    out_spec = pl.BlockSpec((batch_tile, dim_x), lambda i: (i, 0))

    # --- advisory cost estimate (real dims) ----------------------------------
    itemsize = jnp.dtype(s.dtype).itemsize
    flops = 2 * batch_p * sum(dims[i] * dims[i + 1] for i in range(n_layers))
    transcendentals = batch_p * sum(dims[1:])
    bytes_accessed = (
        itemsize * batch_p * (dim_s + dim_x)
        + 4 * sum(dims[i] * dims[i + 1] + dims[i + 1] for i in range(n_layers))
    )
    cost = pl.CostEstimate(
        flops=int(flops),
        transcendentals=int(transcendentals),
        bytes_accessed=int(bytes_accessed),
    )

    out = pl.pallas_call(
        _make_kernel(n_layers),
        out_shape=jax.ShapeDtypeStruct((batch_p, dim_x), s.dtype),
        grid=grid,
        in_specs=in_specs,
        out_specs=out_spec,
        compiler_params=pltpu.CompilerParams(
            dimension_semantics=("parallel",),
        ),
        cost_estimate=cost,
    )(s_in, *flat_params)

    if batch_p != batch:
        out = out[:batch]
    return out


def init_params(key, dims):
    """Deterministic init mimicking nn.Linear default (uniform +-1/sqrt(fan_in))."""
    params = []
    for i in range(len(dims) - 1):
        fan_in, fan_out = dims[i], dims[i + 1]
        key, kw, kb = jax.random.split(key, 3)
        bound = 1.0 / jnp.sqrt(fan_in)
        w = jax.random.uniform(kw, (fan_in, fan_out), jnp.float32, -bound, bound)
        b = jax.random.uniform(kb, (1, fan_out), jnp.float32, -bound, bound)
        params.append((w, b))
    return params


def mlpx1s_reference(s, params):
    h = s.astype(jnp.float32)
    for w, b in params:
        h = 1.0 / (1.0 + jnp.exp(-(h @ w + b)))
    return h


if __name__ == "__main__":
    # MLPx1s(dim_s=8, dims_pres2postx=[32, 32], dim_x=16, actv='Sigmoid')
    dim_s, dims_pres2postx, dim_x = 8, [32, 32], 16
    dims = [dim_s] + dims_pres2postx + [dim_x]

    key = jax.random.PRNGKey(0)
    key, ks1, ks2, ks3 = jax.random.split(key, 4)
    params = init_params(key, dims)

    # Case 1: batch that is already a sublane multiple (single-tile path).
    batch = 16
    s = jax.random.normal(ks1, (batch, dim_s), jnp.float32)
    out = jax.block_until_ready(mlpx1s_forward(s, params))
    ref = mlpx1s_reference(s, params)
    assert out.shape == (batch, dim_x)
    assert jnp.allclose(out, ref, atol=1e-3, rtol=1e-3), "mismatch vs JAX reference"

    # Case 2: ragged batch exercising the batch-padding path.
    batch2 = 13
    s2 = jax.random.normal(ks2, (batch2, dim_s), jnp.float32)
    out2 = jax.block_until_ready(mlpx1s_forward(s2, params))
    ref2 = mlpx1s_reference(s2, params)
    assert out2.shape == (batch2, dim_x)
    assert jnp.allclose(out2, ref2, atol=1e-3, rtol=1e-3), "mismatch vs JAX reference"

    # Case 3: batch > 512 exercising the multi-tile (>=2 grid steps) path.
    batch3 = 600
    s3 = jax.random.normal(ks3, (batch3, dim_s), jnp.float32)
    out3 = jax.block_until_ready(mlpx1s_forward(s3, params))
    ref3 = mlpx1s_reference(s3, params)
    assert out3.shape == (batch3, dim_x)
    assert jnp.allclose(out3, ref3, atol=1e-3, rtol=1e-3), "mismatch vs JAX reference"

    print("KERNEL_OK")
</pallas_src>

<mosaic_0001>
module attributes {stable_mosaic.version = 11 : i64} {
  func.func @kernel(%arg0: i32, %arg1: memref<16x8xf32, #tpu.memory_space<vmem>>, %arg2: memref<8x32xf32, #tpu.memory_space<vmem>>, %arg3: memref<1x32xf32, #tpu.memory_space<vmem>>, %arg4: memref<32x32xf32, #tpu.memory_space<vmem>>, %arg5: memref<1x32xf32, #tpu.memory_space<vmem>>, %arg6: memref<32x16xf32, #tpu.memory_space<vmem>>, %arg7: memref<1x16xf32, #tpu.memory_space<vmem>>, %arg8: memref<16x16xf32, #tpu.memory_space<vmem>>) attributes {dimension_semantics = [#tpu.dimension_semantics<parallel>], iteration_bounds = array<i64: 1>, scalar_prefetch = 0 : i64, scratch_operands = 0 : i64, tpu.core_type = #tpu.core_type<tc>, window_params = [{transform_indices = @transform_0, window_bounds = array<i64: 16, 8>}, {pipeline_mode = #tpu.pipeline_mode<synchronous>, transform_indices = @transform_1, window_bounds = array<i64: 8, 32>}, {pipeline_mode = #tpu.pipeline_mode<synchronous>, transform_indices = @transform_2, window_bounds = array<i64: 1, 32>}, {pipeline_mode = #tpu.pipeline_mode<synchronous>, transform_indices = @transform_3, window_bounds = array<i64: 32, 32>}, {pipeline_mode = #tpu.pipeline_mode<synchronous>, transform_indices = @transform_4, window_bounds = array<i64: 1, 32>}, {pipeline_mode = #tpu.pipeline_mode<synchronous>, transform_indices = @transform_5, window_bounds = array<i64: 32, 16>}, {pipeline_mode = #tpu.pipeline_mode<synchronous>, transform_indices = @transform_6, window_bounds = array<i64: 1, 16>}, {transform_indices = @transform_7, window_bounds = array<i64: 16, 16>}]} {
    %c0 = arith.constant 0 : index
    %c0_0 = arith.constant 0 : index
    %0 = vector.load %arg1[%c0, %c0_0] : memref<16x8xf32, #tpu.memory_space<vmem>>, vector<16x8xf32>
    %c0_1 = arith.constant 0 : index
    %c0_2 = arith.constant 0 : index
    %1 = vector.load %arg2[%c0_1, %c0_2] : memref<8x32xf32, #tpu.memory_space<vmem>>, vector<8x32xf32>
    %cst = arith.constant dense<0.000000e+00> : vector<16x32xf32>
    %2 = tpu.matmul %0, %1, %cst {dimension_numbers = #tpu.dot_dimension_numbers<[1], [0], [0], [1], [0, 0, 1, 1], [], []>} : vector<16x8xf32>, vector<8x32xf32>, vector<16x32xf32> -> vector<16x32xf32>
    %c0_3 = arith.constant 0 : index
    %c0_4 = arith.constant 0 : index
    %3 = vector.load %arg3[%c0_3, %c0_4] : memref<1x32xf32, #tpu.memory_space<vmem>>, vector<1x32xf32>
    %4 = vector.broadcast %3 : vector<1x32xf32> to vector<16x32xf32>
    %5 = arith.addf %2, %4 : vector<16x32xf32>
    %cst_5 = arith.constant 5.000000e-01 : f32
    %6 = vector.broadcast %cst_5 : f32 to vector<16x32xf32>
    %7 = arith.mulf %6, %5 : vector<16x32xf32>
    %8 = math.tanh %7 : vector<16x32xf32>
    %cst_6 = arith.constant 5.000000e-01 : f32
    %9 = vector.broadcast %cst_6 : f32 to vector<16x32xf32>
    %10 = arith.mulf %9, %8 : vector<16x32xf32>
    %cst_7 = arith.constant 5.000000e-01 : f32
    %11 = vector.broadcast %cst_7 : f32 to vector<16x32xf32>
    %12 = arith.addf %10, %11 : vector<16x32xf32>
    %c0_8 = arith.constant 0 : index
    %c0_9 = arith.constant 0 : index
    %13 = vector.load %arg4[%c0_8, %c0_9] : memref<32x32xf32, #tpu.memory_space<vmem>>, vector<32x32xf32>
    %cst_10 = arith.constant dense<0.000000e+00> : vector<16x32xf32>
    %14 = tpu.matmul %12, %13, %cst_10 {dimension_numbers = #tpu.dot_dimension_numbers<[1], [0], [0], [1], [0, 0, 1, 1], [], []>} : vector<16x32xf32>, vector<32x32xf32>, vector<16x32xf32> -> vector<16x32xf32>
    %c0_11 = arith.constant 0 : index
    %c0_12 = arith.constant 0 : index
    %15 = vector.load %arg5[%c0_11, %c0_12] : memref<1x32xf32, #tpu.memory_space<vmem>>, vector<1x32xf32>
    %16 = vector.broadcast %15 : vector<1x32xf32> to vector<16x32xf32>
    %17 = arith.addf %14, %16 : vector<16x32xf32>
    %cst_13 = arith.constant 5.000000e-01 : f32
    %18 = vector.broadcast %cst_13 : f32 to vector<16x32xf32>
    %19 = arith.mulf %18, %17 : vector<16x32xf32>
    %20 = math.tanh %19 : vector<16x32xf32>
    %cst_14 = arith.constant 5.000000e-01 : f32
    %21 = vector.broadcast %cst_14 : f32 to vector<16x32xf32>
    %22 = arith.mulf %21, %20 : vector<16x32xf32>
    %cst_15 = arith.constant 5.000000e-01 : f32
    %23 = vector.broadcast %cst_15 : f32 to vector<16x32xf32>
    %24 = arith.addf %22, %23 : vector<16x32xf32>
    %c0_16 = arith.constant 0 : index
    %c0_17 = arith.constant 0 : index
    %25 = vector.load %arg6[%c0_16, %c0_17] : memref<32x16xf32, #tpu.memory_space<vmem>>, vector<32x16xf32>
    %cst_18 = arith.constant dense<0.000000e+00> : vector<16x16xf32>
    %26 = tpu.matmul %24, %25, %cst_18 {dimension_numbers = #tpu.dot_dimension_numbers<[1], [0], [0], [1], [0, 0, 1, 1], [], []>} : vector<16x32xf32>, vector<32x16xf32>, vector<16x16xf32> -> vector<16x16xf32>
    %c0_19 = arith.constant 0 : index
    %c0_20 = arith.constant 0 : index
    %27 = vector.load %arg7[%c0_19, %c0_20] : memref<1x16xf32, #tpu.memory_space<vmem>>, vector<1x16xf32>
    %28 = vector.broadcast %27 : vector<1x16xf32> to vector<16x16xf32>
    %29 = arith.addf %26, %28 : vector<16x16xf32>
    %cst_21 = arith.constant 5.000000e-01 : f32
    %30 = vector.broadcast %cst_21 : f32 to vector<16x16xf32>
    %31 = arith.mulf %30, %29 : vector<16x16xf32>
    %32 = math.tanh %31 : vector<16x16xf32>
    %cst_22 = arith.constant 5.000000e-01 : f32
    %33 = vector.broadcast %cst_22 : f32 to vector<16x16xf32>
    %34 = arith.mulf %33, %32 : vector<16x16xf32>
    %cst_23 = arith.constant 5.000000e-01 : f32
    %35 = vector.broadcast %cst_23 : f32 to vector<16x16xf32>
    %36 = arith.addf %34, %35 : vector<16x16xf32>
    %c0_24 = arith.constant 0 : index
    %c0_25 = arith.constant 0 : index
    %37 = vector.load %arg8[%c0_24, %c0_25] : memref<16x16xf32, #tpu.memory_space<vmem>>, vector<16x16xf32>
    tpu.vector_store %arg8[%c0_24, %c0_25], %36 {strides = array<i32>} : memref<16x16xf32, #tpu.memory_space<vmem>>, vector<16x16xf32>,
    return
  }
  func.func @transform_0(%arg0: i32) -> (i32, i32) {
    %c0_i32 = arith.constant 0 : i32
    %c0_i32_0 = arith.constant 0 : i32
    return %arg0, %c0_i32 : i32, i32
  }
  func.func @transform_1(%arg0: i32) -> (i32, i32) {
    %c0_i32 = arith.constant 0 : i32
    %c0_i32_0 = arith.constant 0 : i32
    %c0_i32_1 = arith.constant 0 : i32
    return %c0_i32, %c0_i32_0 : i32, i32
  }
  func.func @transform_2(%arg0: i32) -> (i32, i32) {
    %c0_i32 = arith.constant 0 : i32
    %c0_i32_0 = arith.constant 0 : i32
    %c0_i32_1 = arith.constant 0 : i32
    return %c0_i32, %c0_i32_0 : i32, i32
  }
  func.func @transform_3(%arg0: i32) -> (i32, i32) {
    %c0_i32 = arith.constant 0 : i32
    %c0_i32_0 = arith.constant 0 : i32
    %c0_i32_1 = arith.constant 0 : i32
    return %c0_i32, %c0_i32_0 : i32, i32
  }
  func.func @transform_4(%arg0: i32) -> (i32, i32) {
    %c0_i32 = arith.constant 0 : i32
    %c0_i32_0 = arith.constant 0 : i32
    %c0_i32_1 = arith.constant 0 : i32
    return %c0_i32, %c0_i32_0 : i32, i32
  }
  func.func @transform_5(%arg0: i32) -> (i32, i32) {
    %c0_i32 = arith.constant 0 : i32
    %c0_i32_0 = arith.constant 0 : i32
    %c0_i32_1 = arith.constant 0 : i32
    return %c0_i32, %c0_i32_0 : i32, i32
  }
  func.func @transform_6(%arg0: i32) -> (i32, i32) {
    %c0_i32 = arith.constant 0 : i32
    %c0_i32_0 = arith.constant 0 : i32
    %c0_i32_1 = arith.constant 0 : i32
    return %c0_i32, %c0_i32_0 : i32, i32
  }
  func.func @transform_7(%arg0: i32) -> (i32, i32) {
    %c0_i32 = arith.constant 0 : i32
    %c0_i32_0 = arith.constant 0 : i32
    return %arg0, %c0_i32 : i32, i32
  }
}

</mosaic_0001>

<llo_original>
// kernel: mlpx1s_forward.1
$region0: #{mlpx1s_forward.1}
  #allocation0 [shape = 'u32[]', space=smem, size = 0x4, offset = 0x4, fixed_abs, tag = 'smem constant byte address 0x4 - core index']
  #allocation1 [shape = 'u32[72,128]{1,0:T(1,128)}', space=vmem, size = 0x9000, scoped, tag = 'internal scratch']
  %s0 = inlined_call_operand.vmem [shape: f32[16,8], index: 0, kind: input, shape index: {}]
  %s1 = inlined_call_operand.vmem [shape: f32[8,32], index: 1, kind: input, shape index: {}]
  %s2 = inlined_call_operand.vmem [shape: f32[1,32], index: 2, kind: input, shape index: {}]
  %s3 = inlined_call_operand.vmem [shape: f32[32,32], index: 3, kind: input, shape index: {}]
  %s4 = inlined_call_operand.vmem [shape: f32[1,32], index: 4, kind: input, shape index: {}]
  %s5 = inlined_call_operand.vmem [shape: f32[32,16], index: 5, kind: input, shape index: {}]
  %s6 = inlined_call_operand.vmem [shape: f32[1,16], index: 6, kind: input, shape index: {}]
  %s7 = inlined_call_operand.hbm [shape: f32[16,16], index: 7, kind: output, shape index: {}]
  %s8 = sld [smem:[#allocation0]]
  $region38: #{mlpx1s_forward.1} parent=0
    _
  %s10 = ssub.s32 1, %s8
  %s11 = scalar_select 0, %s10, %s8
  $region1: #{mlpx1s_forward.1} parent=0
    #allocation2 [shape = 'u8[8192]{0}', space=vmem, size = 0x2000, scoped, tag = 'output window, operand 0, single buffered']
    #allocation3 [shape = 's32[1]{0}', space=sflag, size = 0x4, scoped, tag = 'scoped memory for mlpx1s_forward.1']
    %12 = vsyncpa [#allocation3], 0
    // Predicated region
    $region2: #{mlpx1s_forward.1} parent=1 // pred_check
      _
    $region3: #{mlpx1s_forward.1} parent=1 // pred_check_branch
      %14 = sbr.rel (0) target = $region5
    $region4: #{mlpx1s_forward.1} parent=1 // pred_region
      _
    $region5: #{mlpx1s_forward.1} parent=1 // pred_fallthru
      _
    // Predicated region
    $region6: #{mlpx1s_forward.1} parent=1 // pred_check
      _
    $region7: #{mlpx1s_forward.1} parent=1 // pred_check_branch
      %16 = sbr.rel (0) target = $region9
    $region8: #{mlpx1s_forward.1} parent=1 // pred_region
      _
    $region9: #{mlpx1s_forward.1} parent=1 // pred_fallthru
      _
    // Predicated region
    $region10: #{mlpx1s_forward.1} parent=1 // pred_check
      _
    $region11: #{mlpx1s_forward.1} parent=1 // pred_check_branch
      %18 = sbr.rel (0) target = $region13
    $region12: #{mlpx1s_forward.1} parent=1 // pred_region
      _
    $region13: #{mlpx1s_forward.1} parent=1 // pred_fallthru
      _
    // Predicated region
    $region14: #{mlpx1s_forward.1} parent=1 // pred_check
      _
    $region15: #{mlpx1s_forward.1} parent=1 // pred_check_branch
      %20 = sbr.rel (0) target = $region17
    $region16: #{mlpx1s_forward.1} parent=1 // pred_region
      _
    $region17: #{mlpx1s_forward.1} parent=1 // pred_fallthru
      _
    // Predicated region
    $region18: #{mlpx1s_forward.1} parent=1 // pred_check
      _
    $region19: #{mlpx1s_forward.1} parent=1 // pred_check_branch
      %22 = sbr.rel (0) target = $region21
    $region20: #{mlpx1s_forward.1} parent=1 // pred_region
      _
    $region21: #{mlpx1s_forward.1} parent=1 // pred_fallthru
      _
    // Predicated region
    $region22: #{mlpx1s_forward.1} parent=1 // pred_check
      _
    $region23: #{mlpx1s_forward.1} parent=1 // pred_check_branch
      %24 = sbr.rel (0) target = $region25
    $region24: #{mlpx1s_forward.1} parent=1 // pred_region
      _
    $region25: #{mlpx1s_forward.1} parent=1 // pred_fallthru
      _
    // Predicated region
    $region26: #{mlpx1s_forward.1} parent=1 // pred_check
      _
    $region27: #{mlpx1s_forward.1} parent=1 // pred_check_branch
      %26 = sbr.rel (0) target = $region29
    $region28: #{mlpx1s_forward.1} parent=1 // pred_region
      _
    $region29: #{mlpx1s_forward.1} parent=1 // pred_fallthru
      _
    %v27 = vld [vmem:[%s0] sm:$0xff]
    %v28 = vld [vmem:[%s0 + $0x8] sm:$0xff]
    %v29 = vld [vmem:[%s1] sm:$0xff]
    %v30 = vld [vmem:[%s2] sm:$0x1]
    %v32 = vperm.slane %v30, 0
    %vm34 = vcmask 64512
    %v36 = vsel %vm34, %v27, 0
    %v39 = vsel %vm34, %v28, 0
    %41 = vmatpush.msra.mxu0 0.0
    %42 = vmatpush.msra.mxu0 0.0
    %43 = vmatpush.msra.mxu0 0.0
    %44 = vmatpush.msra.mxu0 0.0
    %45 = vmatpush.msra.mxu0 0.0
    %46 = vmatpush.msra.mxu0 0.0
    %47 = vmatpush.msra.mxu0 0.0
    %48 = vmatpush.msra.mxu0 0.0
    %49 = vmatpush.msra.mxu0 0.0
    %50 = vmatpush.msra.mxu0 0.0
    %51 = vmatpush.msra.mxu0 0.0
    %52 = vmatpush.msra.mxu0 0.0
    %53 = vmatpush.msra.mxu0 0.0
    %54 = vmatpush.msra.mxu0 0.0
    %55 = vmatpush.msra.mxu0 0.0
    %56 = vmatpush.msra.mxu0 %v29
    %57 = vmatmul.f32.gmra.mxu0 %v36
    %v58 = vpop.f32.mrf.mxu0
    %v59 = vadd.f32 %v32, %v58
    %60 = vmatmul.f32.gmra.mxu0 %v39
    %v61 = vpop.f32.mrf.mxu0
    %v62 = vadd.f32 %v32, %v61
    %63 = vdwg.mxu0
    %v64 = vmul.f32 %v59, 0.5
    %v65 = vmul.f32 %v62, 0.5
    %v66 = vtanh.pop %v64
    %v67 = vtanh.pop %v65
    %v68 = vmul.f32 %v66, 0.5
    %v69 = vmul.f32 %v67, 0.5
    %v70 = vadd.f32 %v68, 0.5
    %v71 = vadd.f32 %v69, 0.5
    %v72 = vld [vmem:[%s3] sm:$0xff]
    %v73 = vld [vmem:[%s3 + $0x8] sm:$0xff]
    %v74 = vld [vmem:[%s3 + $0x10] sm:$0xff]
    %v75 = vld [vmem:[%s3 + $0x18] sm:$0xff]
    %v76 = vld [vmem:[%s4] sm:$0x1]
    %v78 = vperm.slane %v76, 0
    %vm80 = vcmask 261120
    %v82 = vsel %vm80, %v70, 0
    %v85 = vsel %vm80, %v71, 0
    %87 = vmatpush.msra.mxu0 0.0
    %88 = vmatpush.msra.mxu0 0.0
    %89 = vmatpush.msra.mxu0 0.0
    %90 = vmatpush.msra.mxu0 0.0
    %91 = vmatpush.msra.mxu0 0.0
    %92 = vmatpush.msra.mxu0 0.0
    %93 = vmatpush.msra.mxu0 0.0
    %94 = vmatpush.msra.mxu0 0.0
    %95 = vmatpush.msra.mxu0 0.0
    %96 = vmatpush.msra.mxu0 0.0
    %97 = vmatpush.msra.mxu0 0.0
    %98 = vmatpush.msra.mxu0 0.0
    %99 = vmatpush.msra.mxu0 %v75
    %100 = vmatpush.msra.mxu0 %v74
    %101 = vmatpush.msra.mxu0 %v73
    %102 = vmatpush.msra.mxu0 %v72
    %103 = vmatmul.f32.gmra.mxu0 %v82
    %v104 = vpop.f32.mrf.mxu0
    %v105 = vadd.f32 %v78, %v104
    %106 = vmatmul.f32.gmra.mxu0 %v85
    %v107 = vpop.f32.mrf.mxu0
    %v108 = vadd.f32 %v78, %v107
    %109 = vdwg.mxu0
    %v110 = vmul.f32 %v105, 0.5
    %v111 = vmul.f32 %v108, 0.5
    %v112 = vtanh.pop %v110
    %v113 = vtanh.pop %v111
    %v114 = vmul.f32 %v112, 0.5
    %v115 = vmul.f32 %v113, 0.5
    %v116 = vadd.f32 %v114, 0.5
    %v117 = vadd.f32 %v115, 0.5
    %v118 = vld [vmem:[%s5] sm:$0xff]
    %v119 = vld [vmem:[%s5 + $0x8] sm:$0xff]
    %v120 = vld [vmem:[%s5 + $0x10] sm:$0xff]
    %v121 = vld [vmem:[%s5 + $0x18] sm:$0xff]
    %v122 = vld [vmem:[%s6] sm:$0x1]
    %v124 = vperm.slane %v122, 0
    %v127 = vsel %vm80, %v116, 0
    %v130 = vsel %vm80, %v117, 0
    %132 = vmatpush.msra.mxu0 0.0
    %133 = vmatpush.msra.mxu0 0.0
    %134 = vmatpush.msra.mxu0 0.0
    %135 = vmatpush.msra.mxu0 0.0
    %136 = vmatpush.msra.mxu0 0.0
    %137 = vmatpush.msra.mxu0 0.0
    %138 = vmatpush.msra.mxu0 0.0
    %139 = vmatpush.msra.mxu0 0.0
    %140 = vmatpush.msra.mxu0 0.0
    %141 = vmatpush.msra.mxu0 0.0
    %142 = vmatpush.msra.mxu0 0.0
    %143 = vmatpush.msra.mxu0 0.0
    %144 = vmatpush.msra.mxu0 %v121
    %145 = vmatpush.msra.mxu0 %v120
    %146 = vmatpush.msra.mxu0 %v119
    %147 = vmatpush.msra.mxu0 %v118
    %148 = vmatmul.f32.gmra.mxu0 %v127
    %v149 = vpop.f32.mrf.mxu0
    %v150 = vadd.f32 %v124, %v149
    %151 = vmatmul.f32.gmra.mxu0 %v130
    %v152 = vpop.f32.mrf.mxu0
    %v153 = vadd.f32 %v124, %v152
    %154 = vdwg.mxu0
    %v155 = vmul.f32 %v150, 0.5
    %v156 = vmul.f32 %v153, 0.5
    %v157 = vtanh.pop %v155
    %v158 = vtanh.pop %v156
    %v159 = vmul.f32 %v157, 0.5
    %v160 = vmul.f32 %v158, 0.5
    %v161 = vadd.f32 %v159, 0.5
    %v162 = vadd.f32 %v160, 0.5
    %vm163 = vcmask 130048
    %164 = vst.msk [vmem:[#allocation2] sm:$0xff] %vm163, %v161
    %165 = vst.msk [vmem:[#allocation2 + $0x8] sm:$0xff] %vm163, %v162
    // Predicated region
    $region30: #{mlpx1s_forward.1} parent=1 // pred_check
      _
    $region31: #{mlpx1s_forward.1} parent=1 // pred_check_branch
      %167 = sbr.rel (0) target = $region33
    $region32: #{mlpx1s_forward.1} parent=1 // pred_region
      %169 = vsyncadd [#allocation3], 0
      %s170 = sshll.u32 [#allocation2], 4
      %s171 = int_to_ptr.vmem [resolvable:$true] %s170
      %s172 = sshll.u32 %s7, 4
      %s173 = int_to_ptr.hbm [resolvable:$true] %s172
      %178 = dma.vmem_to_hbm [thread:$0]  %s171, 256, %s173, [#allocation3], 128, 128, 8
    $region33: #{mlpx1s_forward.1} parent=1 // pred_fallthru
      _
    // Predicated region
    $region34: #{mlpx1s_forward.1} parent=1 // pred_check
      _
    $region35: #{mlpx1s_forward.1} parent=1 // pred_check_branch
      %180 = sbr.rel (0) target = $region37
    $region36: #{mlpx1s_forward.1} parent=1 // pred_region
      %182 = dma.done [#allocation3], 256
    $region37: #{mlpx1s_forward.1} parent=1 // pred_fallthru
      _
    %183 = vsyncpa [#allocation3], 1

</llo_original>
